<compile_context>
chip_gen: v7x
topology: tpu7x:2x2x1
jax: 0.10.0
libtpu: 0.0.40
codegen_flags: <defaults>
</compile_context>

<pallas_src>
import functools

import jax
import jax.numpy as jnp
from jax import lax
from jax.experimental import pallas as pl
from jax.experimental.pallas import tpu as pltpu

LANE = 128


def _round_up(x, m):
    return (x + m - 1) // m * m


def _vmem_limit_bytes():
    """Per-generation scoped-VMEM limit with headroom (v7x: 64 MiB, v5e/v6e: 128 MiB)."""
    try:
        cap = pltpu.get_tpu_info().vmem_capacity_bytes
    except Exception:
        cap = 64 << 20  # conservative default (v7x per-TC capacity)
    return int(min(cap - (8 << 20), 100 << 20))


def _pick_tiles(n_pad):
    """Pick (tm, tk) dividing n_pad, up to 512, with >= 2 row tiles (v7x 2-TC split)."""
    tk = 512 if (n_pad % 512 == 0 and n_pad >= 512) else min(256, n_pad)
    if n_pad % 512 == 0 and n_pad // 512 >= 2:
        tm = 512
    elif n_pad // 256 >= 2:
        tm = 256
    else:
        tm = 128
    return tm, tk


# ---------------------------------------------------------------------------
# Fused GCN layer kernel:  out = act(A_hat @ (X @ W) + b)
#   grid = (row_tiles, k_tiles); k is the contraction over neighbor rows.
#   W is VMEM-resident; xw_k = X_k @ W is recomputed per row tile (mem-bound).
#   For f32 outputs (log_softmax layer) the output block itself is the
#   accumulator (it is resident across k); bf16 outputs use an f32 scratch.
# ---------------------------------------------------------------------------
def _fused_layer_kernel(a_ref, x_ref, w_ref, b_ref, o_ref, *scratch,
                        n_valid_cols, activation):
    acc_ref = scratch[0] if scratch else o_ref
    k = pl.program_id(1)

    @pl.when(k == 0)
    def _():
        acc_ref[...] = jnp.zeros_like(acc_ref)

    # Feature transform for this k-panel (f32 MXU accumulation, bf16 for next dot).
    xw_k = jnp.dot(
        x_ref[...], w_ref[...], preferred_element_type=jnp.float32
    ).astype(jnp.bfloat16)
    # Neighbor aggregation partial sum.
    acc_ref[...] += jnp.dot(a_ref[...], xw_k, preferred_element_type=jnp.float32)

    @pl.when(k == pl.num_programs(1) - 1)
    def _():
        h = acc_ref[...] + b_ref[...]  # f32 [tm, fout_pad]
        if activation == "relu":
            o_ref[...] = jnp.maximum(h, 0.0).astype(o_ref.dtype)
        else:
            # Masked log_softmax over the valid (un-padded) lanes only (f32 math).
            col = lax.broadcasted_iota(jnp.int32, h.shape, 1)
            hm = jnp.where(col < n_valid_cols, h, -1e30)
            m = jnp.max(hm, axis=1, keepdims=True)
            z = hm - m
            lse = jnp.log(jnp.sum(jnp.exp(z), axis=1, keepdims=True))
            o_ref[...] = (z - lse).astype(o_ref.dtype)


# ---------------------------------------------------------------------------
# One GCN layer: act(A_hat @ (X @ W) + b), padded/tiled shapes in, padded out.
# ---------------------------------------------------------------------------
def _gcn_layer(a_p, x_p, w_p, b_p, *, activation, n_valid_cols, out_dtype, tm, tk):
    n_pad = a_p.shape[0]
    fin_pad = x_p.shape[1]
    fout_pad = w_p.shape[1]
    row_tiles = n_pad // tm
    k_tiles = n_pad // tk

    use_scratch = out_dtype != jnp.float32
    scratch_shapes = [pltpu.VMEM((tm, fout_pad), jnp.float32)] if use_scratch else []

    out_bytes = jnp.dtype(out_dtype).itemsize
    bytes_accessed = (
        n_pad * n_pad * 2                      # A_hat stream (bf16)
        + row_tiles * n_pad * fin_pad * 2      # X k-panels, re-read per row tile
        + fin_pad * fout_pad * 2               # resident W
        + fout_pad * 4                         # bias
        + n_pad * fout_pad * out_bytes         # output
    )
    flops = (2 * n_pad * n_pad * fout_pad
             + 2 * row_tiles * n_pad * fin_pad * fout_pad)

    kernel = functools.partial(
        _fused_layer_kernel, n_valid_cols=n_valid_cols, activation=activation
    )
    return pl.pallas_call(
        kernel,
        out_shape=jax.ShapeDtypeStruct((n_pad, fout_pad), out_dtype),
        grid_spec=pltpu.PrefetchScalarGridSpec(
            num_scalar_prefetch=0,
            grid=(row_tiles, k_tiles),
            in_specs=[
                pl.BlockSpec((tm, tk), lambda i, k: (i, k)),             # A_hat tile
                pl.BlockSpec((tk, fin_pad), lambda i, k: (k, 0)),        # X k-panel
                pl.BlockSpec((fin_pad, fout_pad), lambda i, k: (0, 0)),  # W (resident)
                pl.BlockSpec((1, fout_pad), lambda i, k: (0, 0)),        # bias
            ],
            out_specs=pl.BlockSpec((tm, fout_pad), lambda i, k: (i, 0)),
            scratch_shapes=scratch_shapes,
        ),
        compiler_params=pltpu.CompilerParams(
            dimension_semantics=("parallel", "arbitrary"),
            vmem_limit_bytes=_vmem_limit_bytes(),
        ),
        cost_estimate=pl.CostEstimate(
            flops=flops,
            transcendentals=(0 if activation == "relu" else n_pad * fout_pad),
            bytes_accessed=bytes_accessed,
        ),
    )(a_p, x_p, w_p, b_p)


# ---------------------------------------------------------------------------
# Plain-JAX glue: dense A_hat = D^{-1/2} (A + I) D^{-1/2}  (PyG gcn_norm),
# built directly at the padded size and cast once to the kernel dtype.
# (The edge scatter-add has no clean rectangular-tile Pallas form.)
# ---------------------------------------------------------------------------
def build_norm_adj(edge_index, num_nodes, n_pad=None, dtype=jnp.bfloat16):
    if n_pad is None:
        n_pad = num_nodes
    src = edge_index[0]
    dst = edge_index[1]
    loop = jnp.arange(num_nodes, dtype=edge_index.dtype)  # add self loops
    src = jnp.concatenate([src, loop])
    dst = jnp.concatenate([dst, loop])
    a = jnp.zeros((n_pad, n_pad), jnp.float32).at[dst, src].add(1.0)
    deg = jnp.sum(a, axis=1)
    dinv = jnp.where(deg > 0.0, lax.rsqrt(deg), 0.0)
    return (dinv[:, None] * a * dinv[None, :]).astype(dtype)


# ---------------------------------------------------------------------------
# Full GCN forward (matches PyTorch GCN.forward(x, edge_index) semantics).
# ---------------------------------------------------------------------------
def gcn_forward(x, edge_index, w1, b1, w2, b2):
    n = x.shape[0]
    c_in, c_hid = w1.shape
    c_out = w2.shape[1]

    n_pad = _round_up(n, 256)           # padding decoupled from tile size
    tm, tk = _pick_tiles(n_pad)
    cin_p = _round_up(c_in, LANE)
    chid_p = _round_up(c_hid, LANE)
    cout_p = _round_up(c_out, LANE)

    # Padded, normalized adjacency directly in the MXU dtype.
    a_p = build_norm_adj(edge_index, n, n_pad, dtype=jnp.bfloat16)

    # Zero-pad to lane-dense / tile-aligned shapes; MXU operands in bf16.
    x_p = jnp.zeros((n_pad, cin_p), jnp.bfloat16).at[:n, :c_in].set(
        x.astype(jnp.bfloat16))
    w1_p = jnp.zeros((cin_p, chid_p), jnp.bfloat16).at[:c_in, :c_hid].set(
        w1.astype(jnp.bfloat16))
    b1_p = jnp.zeros((1, chid_p), jnp.float32).at[:, :c_hid].set(
        b1.reshape(1, -1).astype(jnp.float32))
    w2_p = jnp.zeros((chid_p, cout_p), jnp.bfloat16).at[:c_hid, :c_out].set(
        w2.astype(jnp.bfloat16))
    b2_p = jnp.zeros((1, cout_p), jnp.float32).at[:, :c_out].set(
        b2.reshape(1, -1).astype(jnp.float32))

    # Layer 1: ReLU(A_hat @ (X W1) + b1), kept in bf16 for the next MXU pass.
    h = _gcn_layer(a_p, x_p, w1_p, b1_p, activation="relu",
                   n_valid_cols=c_hid, out_dtype=jnp.bfloat16, tm=tm, tk=tk)
    # Layer 2: log_softmax(A_hat @ (H W2) + b2) over valid classes, f32 out.
    out = _gcn_layer(a_p, h, w2_p, b2_p, activation="log_softmax",
                     n_valid_cols=c_out, out_dtype=jnp.float32, tm=tm, tk=tk)
    return out[:n, :c_out]


def glorot(key, fan_in, fan_out):
    limit = (6.0 / (fan_in + fan_out)) ** 0.5
    return jax.random.uniform(key, (fan_in, fan_out), jnp.float32, -limit, limit)


def gcn_reference(a_hat, x, w1, b1, w2, b2):
    h = jnp.maximum(a_hat @ (x @ w1) + b1.reshape(1, -1), 0.0)
    h2 = a_hat @ (h @ w2) + b2.reshape(1, -1)
    return jax.nn.log_softmax(h2, axis=1)


if __name__ == "__main__":
    # Small example: 256 nodes, 16 input features, 32 hidden, 8 classes.
    N, C_IN, C_HID, C_OUT = 256, 16, 32, 8

    key = jax.random.PRNGKey(0)
    kx, kw1, kb1, kw2, kb2 = jax.random.split(key, 5)

    x = jax.random.normal(kx, (N, C_IN), jnp.float32)

    # Deterministic ring graph, both directions -> edge_index [2, 2N]
    i = jnp.arange(N, dtype=jnp.int32)
    src = jnp.concatenate([i, (i + 1) % N])
    dst = jnp.concatenate([(i + 1) % N, i])
    edge_index = jnp.stack([src, dst], axis=0)

    # Parameters (GCNConv: linear weight [in, out], bias [out]).
    w1 = glorot(kw1, C_IN, C_HID)
    b1 = 0.1 * jax.random.normal(kb1, (C_HID,), jnp.float32)
    w2 = glorot(kw2, C_HID, C_OUT)
    b2 = 0.1 * jax.random.normal(kb2, (C_OUT,), jnp.float32)

    out = gcn_forward(x, edge_index, w1, b1, w2, b2)            # [N, C_OUT] log-probs
    jax.block_until_ready(out)

    # Sanity 1: each row of log_softmax exponentiates+sums to 1 (f32 softmax).
    row_sums = jnp.sum(jnp.exp(out), axis=1)
    assert jnp.allclose(row_sums, jnp.ones_like(row_sums), atol=1e-4)

    # Sanity 2: matches a pure-JAX f32 reference within bf16 tolerance.
    a_hat_f32 = build_norm_adj(edge_index, N, N, dtype=jnp.float32)
    ref = gcn_reference(a_hat_f32, x, w1, b1, w2, b2)
    assert jnp.max(jnp.abs(out - ref)) < 0.1

    print("KERNEL_OK")
</pallas_src>

<mosaic_0001>
module attributes {stable_mosaic.version = 11 : i64} {
  func.func @_fused_layer_kernel(%arg0: i32, %arg1: i32, %arg2: memref<128x256xbf16, #tpu.memory_space<vmem>>, %arg3: memref<256x128xbf16, #tpu.memory_space<vmem>>, %arg4: memref<128x128xbf16, #tpu.memory_space<vmem>>, %arg5: memref<1x128xf32, #tpu.memory_space<vmem>>, %arg6: memref<128x128xbf16, #tpu.memory_space<vmem>>, %arg7: memref<128x128xf32, #tpu.memory_space<vmem>>) attributes {dimension_semantics = [#tpu.dimension_semantics<parallel>, #tpu.dimension_semantics<arbitrary>], iteration_bounds = array<i64: 2, 1>, scalar_prefetch = 0 : i64, scratch_operands = 1 : i64, tpu.core_type = #tpu.core_type<tc>, window_params = [{transform_indices = @transform_0, window_bounds = array<i64: 128, 256>}, {transform_indices = @transform_1, window_bounds = array<i64: 256, 128>}, {pipeline_mode = #tpu.pipeline_mode<synchronous>, transform_indices = @transform_2, window_bounds = array<i64: 128, 128>}, {pipeline_mode = #tpu.pipeline_mode<synchronous>, transform_indices = @transform_3, window_bounds = array<i64: 1, 128>}, {transform_indices = @transform_4, window_bounds = array<i64: 128, 128>}]} {
    %c0_i32 = arith.constant 0 : i32
    %0 = arith.cmpi eq, %arg1, %c0_i32 : i32
    %1 = arith.extui %0 : i1 to i32
    %c0_i32_0 = arith.constant 0 : i32
    %2 = arith.cmpi ne, %1, %c0_i32_0 : i32
    scf.if %2 {
      %cst_13 = arith.constant 0.000000e+00 : f32
      %15 = vector.broadcast %cst_13 : f32 to vector<128x128xf32>
      %c0_14 = arith.constant 0 : index
      %c0_15 = arith.constant 0 : index
      %16 = vector.load %arg7[%c0_14, %c0_15] : memref<128x128xf32, #tpu.memory_space<vmem>>, vector<128x128xf32>
      tpu.vector_store %arg7[%c0_14, %c0_15], %15 {strides = array<i32>} : memref<128x128xf32, #tpu.memory_space<vmem>>, vector<128x128xf32>,
    } else {
    }
    %c0 = arith.constant 0 : index
    %c0_1 = arith.constant 0 : index
    %3 = vector.load %arg3[%c0, %c0_1] : memref<256x128xbf16, #tpu.memory_space<vmem>>, vector<256x128xbf16>
    %c0_2 = arith.constant 0 : index
    %c0_3 = arith.constant 0 : index
    %4 = vector.load %arg4[%c0_2, %c0_3] : memref<128x128xbf16, #tpu.memory_space<vmem>>, vector<128x128xbf16>
    %cst = arith.constant dense<0.000000e+00> : vector<256x128xf32>
    %5 = tpu.matmul %3, %4, %cst {dimension_numbers = #tpu.dot_dimension_numbers<[1], [0], [0], [1], [0, 0, 1, 1], [], []>} : vector<256x128xbf16>, vector<128x128xbf16>, vector<256x128xf32> -> vector<256x128xf32>
    %6 = arith.truncf %5 : vector<256x128xf32> to vector<256x128xbf16>
    %c0_4 = arith.constant 0 : index
    %c0_5 = arith.constant 0 : index
    %7 = vector.load %arg7[%c0_4, %c0_5] : memref<128x128xf32, #tpu.memory_space<vmem>>, vector<128x128xf32>
    %c0_6 = arith.constant 0 : index
    %c0_7 = arith.constant 0 : index
    %8 = vector.load %arg2[%c0_6, %c0_7] : memref<128x256xbf16, #tpu.memory_space<vmem>>, vector<128x256xbf16>
    %cst_8 = arith.constant dense<0.000000e+00> : vector<128x128xf32>
    %9 = tpu.matmul %8, %6, %cst_8 {dimension_numbers = #tpu.dot_dimension_numbers<[1], [0], [0], [1], [0, 0, 1, 1], [], []>} : vector<128x256xbf16>, vector<256x128xbf16>, vector<128x128xf32> -> vector<128x128xf32>
    %10 = arith.addf %7, %9 : vector<128x128xf32>
    %c0_9 = arith.constant 0 : index
    %c0_10 = arith.constant 0 : index
    %11 = vector.load %arg7[%c0_9, %c0_10] : memref<128x128xf32, #tpu.memory_space<vmem>>, vector<128x128xf32>
    tpu.vector_store %arg7[%c0_9, %c0_10], %10 {strides = array<i32>} : memref<128x128xf32, #tpu.memory_space<vmem>>, vector<128x128xf32>,
    %c0_i32_11 = arith.constant 0 : i32
    %12 = arith.cmpi eq, %arg1, %c0_i32_11 : i32
    %13 = arith.extui %12 : i1 to i32
    %c0_i32_12 = arith.constant 0 : i32
    %14 = arith.cmpi ne, %13, %c0_i32_12 : i32
    scf.if %14 {
      %c0_13 = arith.constant 0 : index
      %c0_14 = arith.constant 0 : index
      %15 = vector.load %arg7[%c0_13, %c0_14] : memref<128x128xf32, #tpu.memory_space<vmem>>, vector<128x128xf32>
      %c0_15 = arith.constant 0 : index
      %c0_16 = arith.constant 0 : index
      %16 = vector.load %arg5[%c0_15, %c0_16] : memref<1x128xf32, #tpu.memory_space<vmem>>, vector<1x128xf32>
      %17 = vector.broadcast %16 : vector<1x128xf32> to vector<128x128xf32>
      %18 = arith.addf %15, %17 : vector<128x128xf32>
      %cst_17 = arith.constant 0.000000e+00 : f32
      %19 = vector.broadcast %cst_17 : f32 to vector<128x128xf32>
      %20 = arith.maximumf %18, %19 : vector<128x128xf32>
      %21 = arith.truncf %20 : vector<128x128xf32> to vector<128x128xbf16>
      %c0_18 = arith.constant 0 : index
      %c0_19 = arith.constant 0 : index
      %22 = vector.load %arg6[%c0_18, %c0_19] : memref<128x128xbf16, #tpu.memory_space<vmem>>, vector<128x128xbf16>
      tpu.vector_store %arg6[%c0_18, %c0_19], %21 {strides = array<i32>} : memref<128x128xbf16, #tpu.memory_space<vmem>>, vector<128x128xbf16>,
    } else {
    }
    return
  }
  func.func @transform_0(%arg0: i32, %arg1: i32) -> (i32, i32) {
    %c0_i32 = arith.constant 0 : i32
    return %arg0, %arg1 : i32, i32
  }
  func.func @transform_1(%arg0: i32, %arg1: i32) -> (i32, i32) {
    %c0_i32 = arith.constant 0 : i32
    %c0_i32_0 = arith.constant 0 : i32
    return %arg1, %c0_i32 : i32, i32
  }
  func.func @transform_2(%arg0: i32, %arg1: i32) -> (i32, i32) {
    %c0_i32 = arith.constant 0 : i32
    %c0_i32_0 = arith.constant 0 : i32
    %c0_i32_1 = arith.constant 0 : i32
    return %c0_i32, %c0_i32_0 : i32, i32
  }
  func.func @transform_3(%arg0: i32, %arg1: i32) -> (i32, i32) {
    %c0_i32 = arith.constant 0 : i32
    %c0_i32_0 = arith.constant 0 : i32
    %c0_i32_1 = arith.constant 0 : i32
    return %c0_i32, %c0_i32_0 : i32, i32
  }
  func.func @transform_4(%arg0: i32, %arg1: i32) -> (i32, i32) {
    %c0_i32 = arith.constant 0 : i32
    %c0_i32_0 = arith.constant 0 : i32
    return %arg0, %c0_i32 : i32, i32
  }
}

</mosaic_0001>

<llo_original>
// kernel: tpu_custom_call.1
$region0: #{tpu_custom_call.1}
  #allocation0 [shape = 'u32[]', space=smem, size = 0x4, offset = 0x4, fixed_abs, tag = 'smem constant byte address 0x4 - core index']
  #allocation1 [shape = 'u32[144,128]{1,0:T(1,128)}', space=vmem, size = 0x12000, scoped, tag = 'internal scratch']
  #allocation2 [shape = 'f32[128,128]{1,0:T(8,128)}', space=vmem, size = 0x10000, scoped, tag = 'scratch operand']
  %s0 = inlined_call_operand.hbm [shape: bf16[256,256], index: 0, kind: input, shape index: {}]
  %s1 = inlined_call_operand.hbm [shape: bf16[256,128], index: 1, kind: input, shape index: {}]
  %s2 = inlined_call_operand.hbm [shape: bf16[128,128], index: 2, kind: input, shape index: {}]
  %s3 = inlined_call_operand.vmem [shape: f32[1,128], index: 3, kind: input, shape index: {}]
  %s4 = inlined_call_operand.hbm [shape: bf16[256,128], index: 4, kind: output, shape index: {}]
  %s5 = sld [smem:[#allocation0]]
  $region69: #{tpu_custom_call.1} parent=0
    _
  %s7 = ssub.s32 1, %s5
  %s8 = scalar_select 0, %s7, %s5
  $region1: #{tpu_custom_call.1} parent=0
    #allocation3 [shape = 'u8[131072]{0}', space=vmem, size = 0x20000, scoped, tag = 'input window, operand 0']
    #allocation4 [shape = 's32[2]{0}', space=sflag, size = 0x8, scoped, tag = 'scoped memory for tpu_custom_call.1']
    #allocation5 [shape = 's32[2]{0}', space=sflag, size = 0x8, scoped, tag = 'scoped memory for tpu_custom_call.1']
    #allocation6 [shape = 'u8[65536]{0}', space=vmem, size = 0x10000, scoped, tag = 'input window, operand 1, single buffered']
    #allocation7 [shape = 's32[1]{0}', space=sflag, size = 0x4, scoped, tag = 'scoped memory for tpu_custom_call.1']
    #allocation8 [shape = 'u8[32768]{0}', space=vmem, size = 0x8000, scoped, tag = 'input window, operand 2, single buffered']
    #allocation9 [shape = 'u8[65536]{0}', space=vmem, size = 0x10000, scoped, tag = 'output window, operand 0']
    %9 = vsyncpa [#allocation4], 0
    %s10 = scalar_lea.sflag [#allocation4], 1
    %11 = vsyncpa %s10, 0
    %12 = vsyncpa [#allocation7], 0
    %13 = vsyncpa [#allocation5], 0
    %s14 = scalar_lea.sflag [#allocation5], 1
    %15 = vsyncpa %s14, 0
    loop: start=0, step=1, limit=4
    $region2: #{tpu_custom_call.1} parent=1 // loop_pre_header
      _
    $region3: #{tpu_custom_call.1} parent=1 // loop_header
      %s17 = sphi 0, %s21
      %p18 = scmp.ge.s32.totalorder %s17, 4
      %s24 = sphi 0, %s36
      %s25 = sphi 0, %s32
      %s26 = sphi 0, %s24
      %s27 = sphi 0, %s25
      %s28 = sphi 0, %s26
      %s29 = sphi 0, %s27
      %s41 = sphi 0, %s43
      %s44 = sphi 0, %s41
      %s45 = sphi 0, %s44
      %s61 = sphi 0, %s45
      %s67 = sphi 0, %s69
      %s70 = sphi 0, %s67
      %s71 = sphi 0, %s70
      %s87 = sphi 0, %s71
      %s91 = sphi 0, %s91
      %s93 = sphi 0, %s91
      %s94 = sphi 0, %s93
      %s108 = sphi 0, %s94
      %s112 = sphi 0, %s112
      %s114 = sphi 0, %s112
      %s115 = sphi 0, %s114
      %s129 = sphi 0, %s115
      %s135 = sphi 0, %s137
      %s138 = sphi 0, %s135
      %s139 = sphi 0, %s138
      %s155 = sphi 0, %s139
    $region4: #{tpu_custom_call.1} parent=1 // loop_header_branch
      %20 = sbr.rel (%p18) target = $region8
    $region5: #{tpu_custom_call.1} parent=1 // loop_body
      %s22 = ssub.s32 %s17, 1
      %s23 = ssub.s32 %s17, 2
      %s30 = sadd.s32 1, %s25
      %p31 = scmp.ge.s32.totalorder %s30, 1
      %s32 = scalar_select %p31, 0, %s30
      %s33 = sadd.s32 1, %s24
      %s34 = scalar_select %p31, %s33, %s24
      %p35 = scmp.ge.s32.totalorder %s34, 2
      %s36 = scalar_select %p35, 0, %s34
      %s37 = ssub.s32 %s24, %s36
      %s38 = ssub.s32 %s25, %s32
      %s39 = sor.u32 %s37, %s38
      %p40 = scmp.eq.s32.totalorder %s39, 0
      %s42 = sadd.s32 %s41, 1
      %s43 = scalar_select %p40, %s41, %s42
      %p46 = pneg %p40
      %p47 = scmp.eq.s32.totalorder %s17, 1
      %p48 = por %p46, %p47
      %p49 = scmp.ne.s32.totalorder %s41, %s44
      %p50 = scmp.eq.s32.totalorder %s17, 0
      %p51 = por %p49, %p50
      %p52 = scmp.ne.s32.totalorder %s41, %s44
      %p53 = scmp.eq.s32.totalorder %s22, 1
      %p54 = por %p52, %p53
      %p55 = scmp.ne.s32.totalorder %s44, %s45
      %p56 = scmp.eq.s32.totalorder %s22, 0
      %p57 = por %p55, %p56
      %p58 = scmp.ne.s32.totalorder %s44, %s45
      %p59 = scmp.eq.s32.totalorder %s23, 1
      %p60 = por %p58, %p59
      %p62 = scmp.ne.s32.totalorder %s45, %s61
      %p63 = scmp.eq.s32.totalorder %s23, 0
      %p64 = por %p62, %p63
      %s65 = ssub.s32 %s25, %s32
      %p66 = scmp.eq.s32.totalorder %s65, 0
      %s68 = sadd.s32 %s67, 1
      %s69 = scalar_select %p66, %s67, %s68
      %p72 = pneg %p66
      %p73 = scmp.eq.s32.totalorder %s17, 1
      %p74 = por %p72, %p73
      %p75 = scmp.ne.s32.totalorder %s67, %s70
      %p76 = scmp.eq.s32.totalorder %s17, 0
      %p77 = por %p75, %p76
      %p78 = scmp.ne.s32.totalorder %s67, %s70
      %p79 = scmp.eq.s32.totalorder %s22, 1
      %p80 = por %p78, %p79
      %p81 = scmp.ne.s32.totalorder %s70, %s71
      %p82 = scmp.eq.s32.totalorder %s22, 0
      %p83 = por %p81, %p82
      %p84 = scmp.ne.s32.totalorder %s70, %s71
      %p85 = scmp.eq.s32.totalorder %s23, 1
      %p86 = por %p84, %p85
      %p88 = scmp.ne.s32.totalorder %s71, %s87
      %p89 = scmp.eq.s32.totalorder %s23, 0
      %p90 = por %p88, %p89
      %s92 = sadd.s32 %s91, 1
      %p95 = scmp.eq.s32.totalorder %s17, 1
      %p96 = scmp.ne.s32.totalorder %s91, %s93
      %p97 = scmp.eq.s32.totalorder %s17, 0
      %p98 = por %p96, %p97
      %p99 = scmp.ne.s32.totalorder %s91, %s93
      %p100 = scmp.eq.s32.totalorder %s22, 1
      %p101 = por %p99, %p100
      %p102 = scmp.ne.s32.totalorder %s93, %s94
      %p103 = scmp.eq.s32.totalorder %s22, 0
      %p104 = por %p102, %p103
      %p105 = scmp.ne.s32.totalorder %s93, %s94
      %p106 = scmp.eq.s32.totalorder %s23, 1
      %p107 = por %p105, %p106
      %p109 = scmp.ne.s32.totalorder %s94, %s108
      %p110 = scmp.eq.s32.totalorder %s23, 0
      %p111 = por %p109, %p110
      %s113 = sadd.s32 %s112, 1
      %p116 = scmp.eq.s32.totalorder %s17, 1
      %p117 = scmp.ne.s32.totalorder %s112, %s114
      %p118 = scmp.eq.s32.totalorder %s17, 0
      %p119 = por %p117, %p118
      %p120 = scmp.ne.s32.totalorder %s112, %s114
      %p121 = scmp.eq.s32.totalorder %s22, 1
      %p122 = por %p120, %p121
      %p123 = scmp.ne.s32.totalorder %s114, %s115
      %p124 = scmp.eq.s32.totalorder %s22, 0
      %p125 = por %p123, %p124
      %p126 = scmp.ne.s32.totalorder %s114, %s115
      %p127 = scmp.eq.s32.totalorder %s23, 1
      %p128 = por %p126, %p127
      %p130 = scmp.ne.s32.totalorder %s115, %s129
      %p131 = scmp.eq.s32.totalorder %s23, 0
      %p132 = por %p130, %p131
      %s133 = ssub.s32 %s24, %s36
      %p134 = scmp.eq.s32.totalorder %s133, 0
      %s136 = sadd.s32 %s135, 1
      %s137 = scalar_select %p134, %s135, %s136
      %p140 = pneg %p134
      %p141 = scmp.eq.s32.totalorder %s17, 1
      %p142 = por %p140, %p141
      %p143 = scmp.ne.s32.totalorder %s135, %s138
      %p144 = scmp.eq.s32.totalorder %s17, 0
      %p145 = por %p143, %p144
      %p146 = scmp.ne.s32.totalorder %s135, %s138
      %p147 = scmp.eq.s32.totalorder %s22, 1
      %p148 = por %p146, %p147
      %p149 = scmp.ne.s32.totalorder %s138, %s139
      %p150 = scmp.eq.s32.totalorder %s22, 0
      %p151 = por %p149, %p150
      %p152 = scmp.ne.s32.totalorder %s138, %s139
      %p153 = scmp.eq.s32.totalorder %s23, 1
      %p154 = por %p152, %p153
      %p156 = scmp.ne.s32.totalorder %s139, %s155
      %p157 = scmp.eq.s32.totalorder %s23, 0
      %p158 = por %p156, %p157
      %p159 = scmp.le.s32.totalorder 1, %s17
      %p160 = scmp.lt.s32.totalorder %s17, 3
      %p161 = pnand %p159, %p160
      %p162 = pneg %p161
      // Predicated region
      $region9: #{tpu_custom_call.1} parent=5 // pred_check
        _
      $region10: #{tpu_custom_call.1} parent=5 // pred_check_branch
        %164 = sbr.rel (%p161) target = $region12
      $region11: #{tpu_custom_call.1} parent=5 // pred_region
        %s165 = ssub.s32 %s17, 1
        // Predicated region
        $region13: #{tpu_custom_call.1} parent=11 // pred_check
          %p166 = pneg %p83
        $region14: #{tpu_custom_call.1} parent=11 // pred_check_branch
          %168 = sbr.rel (%p166) target = $region16
        $region15: #{tpu_custom_call.1} parent=11 // pred_region
          %s169 = smul.u32 32, %s27
          %s171 = ssub.s32 2048, 2048
          %172 = vsyncadd [#allocation7], %s171
          %s173 = smul.addr %s169, 64
          %s174 = scalar_lea.hbm %s1, %s173
          %s175 = sshll.u32 [#allocation6], 4
          %s176 = int_to_ptr.vmem [resolvable:$true] %s175
          %181 = dma.hbm_to_vmem [thread:$0]  %s174, 2048, %s176, [#allocation7], 64, 64, 4
        $region16: #{tpu_custom_call.1} parent=11 // pred_fallthru
          _
        // Predicated region
        $region17: #{tpu_custom_call.1} parent=11 // pred_check
          %p182 = pneg %p104
        $region18: #{tpu_custom_call.1} parent=11 // pred_check_branch
          %184 = sbr.rel (%p182) target = $region20
        $region19: #{tpu_custom_call.1} parent=11 // pred_region
          %s186 = ssub.s32 1024, 1024
          %187 = vsyncadd [#allocation7], %s186
          %s188 = sshll.u32 [#allocation8], 4
          %s189 = int_to_ptr.vmem [resolvable:$true] %s188
          %194 = dma.hbm_to_vmem [thread:$0]  %s2, 1024, %s189, [#allocation7], 64, 64, 4
        $region20: #{tpu_custom_call.1} parent=11 // pred_fallthru
          _
        // Predicated region
        $region21: #{tpu_custom_call.1} parent=11 // pred_check
          %p195 = pneg %p125
        $region22: #{tpu_custom_call.1} parent=11 // pred_check_branch
          %197 = sbr.rel (%p195) target = $region24
        $region23: #{tpu_custom_call.1} parent=11 // pred_region
          _
        $region24: #{tpu_custom_call.1} parent=11 // pred_fallthru
          _
      $region12: #{tpu_custom_call.1} parent=5 // pred_fallthru
        _
      %p198 = scmp.lt.s32.totalorder %s17, 2
      // Predicated region
      $region25: #{tpu_custom_call.1} parent=5 // pred_check
        %p199 = pneg %p198
      $region26: #{tpu_custom_call.1} parent=5 // pred_check_branch
        %201 = sbr.rel (%p199) target = $region28
      $region27: #{tpu_custom_call.1} parent=5 // pred_region
        // Predicated region
        $region29: #{tpu_custom_call.1} parent=27 // pred_check
          %p202 = pneg %p51
        $region30: #{tpu_custom_call.1} parent=27 // pred_check_branch
          %204 = sbr.rel (%p202) target = $region32
        $region31: #{tpu_custom_call.1} parent=27 // pred_region
          %s205 = sand.u32 %s41, 1
          %s206 = scalar_lea.sflag [#allocation4], %s205
          %s207 = sand.u32 %s41, 1
          %s208 = smul.addr %s207, 128
          %s209 = scalar_lea.vmem [#allocation3], %s208
          %s210 = smul.u32 16, %s24
          %s211 = smul.u32 2, %s25
          %s213 = ssub.s32 2048, 2048
          %214 = vsyncadd %s206, %s213
          %s215 = smul.addr %s210, 2
          %s216 = sadd.s32 %s211, %s215
          %s217 = smul.addr %s216, 64
          %s218 = scalar_lea.hbm %s0, %s217
          %s219 = sshll.u32 %s209, 4
          %s220 = int_to_ptr.vmem [resolvable:$true] %s219
          %225 = dma.hbm_to_vmem [thread:$0]  %s218, 2048, %s220, %s206, 128, 128, 8
        $region32: #{tpu_custom_call.1} parent=27 // pred_fallthru
          _
      $region28: #{tpu_custom_call.1} parent=5 // pred_fallthru
        _
      %p226 = scmp.le.s32.totalorder 1, %s17
      %p227 = scmp.lt.s32.totalorder %s17, 3
      %p228 = pnand %p226, %p227
      %p229 = pneg %p228
      // Predicated region
      $region33: #{tpu_custom_call.1} parent=5 // pred_check
        _
      $region34: #{tpu_custom_call.1} parent=5 // pred_check_branch
        %231 = sbr.rel (%p228) target = $region36
      $region35: #{tpu_custom_call.1} parent=5 // pred_region
        %s232 = ssub.s32 %s17, 1
        %s233 = sand.u32 %s44, 1
        %s234 = scalar_lea.sflag [#allocation4], %s233
        %s235 = sand.u32 %s44, 1
        %s236 = smul.addr %s235, 128
        %s237 = scalar_lea.vmem [#allocation3], %s236
        // Predicated region
        $region37: #{tpu_custom_call.1} parent=35 // pred_check
          %p238 = pneg %p57
        $region38: #{tpu_custom_call.1} parent=35 // pred_check_branch
          %240 = sbr.rel (%p238) target = $region40
        $region39: #{tpu_custom_call.1} parent=35 // pred_region
          %241 = dma.done %s234, 2048
        $region40: #{tpu_custom_call.1} parent=35 // pred_fallthru
          _
        // Predicated region
        $region41: #{tpu_custom_call.1} parent=35 // pred_check
          %p242 = pneg %p83
        $region42: #{tpu_custom_call.1} parent=35 // pred_check_branch
          %244 = sbr.rel (%p242) target = $region44
        $region43: #{tpu_custom_call.1} parent=35 // pred_region
          %245 = dma.done [#allocation7], 2048
        $region44: #{tpu_custom_call.1} parent=35 // pred_fallthru
          _
        // Predicated region
        $region45: #{tpu_custom_call.1} parent=35 // pred_check
          %p246 = pneg %p104
        $region46: #{tpu_custom_call.1} parent=35 // pred_check_branch
          %248 = sbr.rel (%p246) target = $region48
        $region47: #{tpu_custom_call.1} parent=35 // pred_region
          %249 = dma.done [#allocation7], 1024
        $region48: #{tpu_custom_call.1} parent=35 // pred_fallthru
          _
        %s250 = sand.u32 %s44, 1
        %s251 = scalar_lea.sflag [#allocation4], %s250
        %s252 = sand.u32 %s44, 1
        %s253 = smul.addr %s252, 128
        %s254 = scalar_lea.vmem [#allocation3], %s253
        %p255 = pneg %p57
        %p256 = pneg %p54
        %p257 = pneg %p83
        %p258 = pneg %p80
        %p259 = pneg %p104
        %p260 = pneg %p101
        %p261 = pneg %p125
        %p262 = pneg %p122
        %p263 = pneg %p151
        %p264 = pneg %p148
        %s265 = sand.u32 %s138, 1
        %s266 = scalar_lea.sflag [#allocation5], %s265
        %s267 = sand.u32 %s138, 1
        %s268 = smul.addr %s267, 64
        %s269 = scalar_lea.vmem [#allocation9], %s268
        %s270 = smul.u32 16, %s26
        %s271 = smul.u32 2, %s27
        %s272 = smul.u32 32, %s27
        %s273 = smul.u32 16, %s26
        %p275 = scmp.eq.s32.totalorder %s27, 0
        // Predicated region
        $region49: #{tpu_custom_call.1} parent=35 // pred_check
          %p276 = pneg %p275
        $region50: #{tpu_custom_call.1} parent=35 // pred_check_branch
          %278 = sbr.rel (%p276) target = $region52
        $region51: #{tpu_custom_call.1} parent=35 // pred_region
          %279 = vst [vmem:[#allocation2] sm:$0xff] 0.0
          %280 = vst [vmem:[#allocation2 + $0x8] sm:$0xff] 0.0
          %281 = vst [vmem:[#allocation2 + $0x10] sm:$0xff] 0.0
          %282 = vst [vmem:[#allocation2 + $0x18] sm:$0xff] 0.0
          %283 = vst [vmem:[#allocation2 + $0x20] sm:$0xff] 0.0
          %284 = vst [vmem:[#allocation2 + $0x28] sm:$0xff] 0.0
          %285 = vst [vmem:[#allocation2 + $0x30] sm:$0xff] 0.0
          %286 = vst [vmem:[#allocation2 + $0x38] sm:$0xff] 0.0
          %287 = vst [vmem:[#allocation2 + $0x40] sm:$0xff] 0.0
          %288 = vst [vmem:[#allocation2 + $0x48] sm:$0xff] 0.0
          %289 = vst [vmem:[#allocation2 + $0x50] sm:$0xff] 0.0
          %290 = vst [vmem:[#allocation2 + $0x58] sm:$0xff] 0.0
          %291 = vst [vmem:[#allocation2 + $0x60] sm:$0xff] 0.0
          %292 = vst [vmem:[#allocation2 + $0x68] sm:$0xff] 0.0
          %293 = vst [vmem:[#allocation2 + $0x70] sm:$0xff] 0.0
          %294 = vst [vmem:[#allocation2 + $0x78] sm:$0xff] 0.0
        $region52: #{tpu_custom_call.1} parent=35 // pred_fallthru
          _
        %v295 = vld [vmem:[#allocation6] sm:$0xf]
        %v296 = vld [vmem:[#allocation6 + $0x4] sm:$0xf]
        %v297 = vld [vmem:[#allocation6 + $0x8] sm:$0xf]
        %v298 = vld [vmem:[#allocation6 + $0xc] sm:$0xf]
        %v299 = vld [vmem:[#allocation6 + $0x10] sm:$0xf]
        %v300 = vld [vmem:[#allocation6 + $0x14] sm:$0xf]
        %v301 = vld [vmem:[#allocation6 + $0x18] sm:$0xf]
        %v302 = vld [vmem:[#allocation6 + $0x1c] sm:$0xf]
        %v303 = vld [vmem:[#allocation6 + $0x20] sm:$0xf]
        %v304 = vld [vmem:[#allocation6 + $0x24] sm:$0xf]
        %v305 = vld [vmem:[#allocation6 + $0x28] sm:$0xf]
        %v306 = vld [vmem:[#allocation6 + $0x2c] sm:$0xf]
        %v307 = vld [vmem:[#allocation6 + $0x30] sm:$0xf]
        %v308 = vld [vmem:[#allocation6 + $0x34] sm:$0xf]
        %v309 = vld [vmem:[#allocation6 + $0x38] sm:$0xf]
        %v310 = vld [vmem:[#allocation6 + $0x3c] sm:$0xf]
        %v311 = vld [vmem:[#allocation6 + $0x40] sm:$0xf]
        %v312 = vld [vmem:[#allocation6 + $0x44] sm:$0xf]
        %v313 = vld [vmem:[#allocation6 + $0x48] sm:$0xf]
        %v314 = vld [vmem:[#allocation6 + $0x4c] sm:$0xf]
        %v315 = vld [vmem:[#allocation6 + $0x50] sm:$0xf]
        %v316 = vld [vmem:[#allocation6 + $0x54] sm:$0xf]
        %v317 = vld [vmem:[#allocation6 + $0x58] sm:$0xf]
        %v318 = vld [vmem:[#allocation6 + $0x5c] sm:$0xf]
        %v319 = vld [vmem:[#allocation6 + $0x60] sm:$0xf]
        %v320 = vld [vmem:[#allocation6 + $0x64] sm:$0xf]
        %v321 = vld [vmem:[#allocation6 + $0x68] sm:$0xf]
        %v322 = vld [vmem:[#allocation6 + $0x6c] sm:$0xf]
        %v323 = vld [vmem:[#allocation6 + $0x70] sm:$0xf]
        %v324 = vld [vmem:[#allocation6 + $0x74] sm:$0xf]
        %v325 = vld [vmem:[#allocation6 + $0x78] sm:$0xf]
        %v326 = vld [vmem:[#allocation6 + $0x7c] sm:$0xf]
        %v327 = vld [vmem:[#allocation8] sm:$0xf]
        %v328 = vld [vmem:[#allocation8 + $0x4] sm:$0xf]
        %v329 = vld [vmem:[#allocation8 + $0x8] sm:$0xf]
        %v330 = vld [vmem:[#allocation8 + $0xc] sm:$0xf]
        %v331 = vld [vmem:[#allocation8 + $0x10] sm:$0xf]
        %v332 = vld [vmem:[#allocation8 + $0x14] sm:$0xf]
        %v333 = vld [vmem:[#allocation8 + $0x18] sm:$0xf]
        %v334 = vld [vmem:[#allocation8 + $0x1c] sm:$0xf]
        %v335 = vld [vmem:[#allocation8 + $0x20] sm:$0xf]
        %v336 = vld [vmem:[#allocation8 + $0x24] sm:$0xf]
        %v337 = vld [vmem:[#allocation8 + $0x28] sm:$0xf]
        %v338 = vld [vmem:[#allocation8 + $0x2c] sm:$0xf]
        %v339 = vld [vmem:[#allocation8 + $0x30] sm:$0xf]
        %v340 = vld [vmem:[#allocation8 + $0x34] sm:$0xf]
        %v341 = vld [vmem:[#allocation8 + $0x38] sm:$0xf]
        %v342 = vld [vmem:[#allocation8 + $0x3c] sm:$0xf]
        %v375 = vunpack.c.l.b16 %v295
        %v376 = vunpack.c.l.b16 %v296
        %v377 = vunpack.c.l.b16 %v297
        %v378 = vunpack.c.l.b16 %v298
        %v379 = vunpack.c.l.b16 %v299
        %v380 = vunpack.c.l.b16 %v300
        %v381 = vunpack.c.l.b16 %v301
        %v382 = vunpack.c.l.b16 %v302
        %v383 = vunpack.c.l.b16 %v303
        %v384 = vunpack.c.l.b16 %v304
        %v385 = vunpack.c.l.b16 %v305
        %v386 = vunpack.c.l.b16 %v306
        %v387 = vunpack.c.l.b16 %v307
        %v388 = vunpack.c.l.b16 %v308
        %v389 = vunpack.c.l.b16 %v309
        %v390 = vunpack.c.l.b16 %v310
        %v391 = vunpack.c.l.b16 %v311
        %v392 = vunpack.c.l.b16 %v312
        %v393 = vunpack.c.l.b16 %v313
        %v394 = vunpack.c.l.b16 %v314
        %v395 = vunpack.c.l.b16 %v315
        %v396 = vunpack.c.l.b16 %v316
        %v397 = vunpack.c.l.b16 %v317
        %v398 = vunpack.c.l.b16 %v318
        %v399 = vunpack.c.l.b16 %v319
        %v400 = vunpack.c.l.b16 %v320
        %v401 = vunpack.c.l.b16 %v321
        %v402 = vunpack.c.l.b16 %v322
        %v403 = vunpack.c.l.b16 %v323
        %v404 = vunpack.c.l.b16 %v324
        %v405 = vunpack.c.l.b16 %v325
        %v406 = vunpack.c.l.b16 %v326
        %v407 = vpack.c.b16 %v376, %v375
        %v408 = vpack.c.b16 %v378, %v377
        %v409 = vpack.c.b16 %v380, %v379
        %v410 = vpack.c.b16 %v382, %v381
        %v411 = vpack.c.b16 %v384, %v383
        %v412 = vpack.c.b16 %v386, %v385
        %v413 = vpack.c.b16 %v388, %v387
        %v414 = vpack.c.b16 %v390, %v389
        %v415 = vpack.c.b16 %v392, %v391
        %v416 = vpack.c.b16 %v394, %v393
        %v417 = vpack.c.b16 %v396, %v395
        %v418 = vpack.c.b16 %v398, %v397
        %v419 = vpack.c.b16 %v400, %v399
        %v420 = vpack.c.b16 %v402, %v401
        %v421 = vpack.c.b16 %v404, %v403
        %v422 = vpack.c.b16 %v406, %v405
        %v455 = vunpack.c.l.b16 %v327
        %v456 = vunpack.c.l.b16 %v328
        %v457 = vunpack.c.l.b16 %v329
        %v458 = vunpack.c.l.b16 %v330
        %v459 = vunpack.c.l.b16 %v331
        %v460 = vunpack.c.l.b16 %v332
        %v461 = vunpack.c.l.b16 %v333
        %v462 = vunpack.c.l.b16 %v334
        %v463 = vunpack.c.l.b16 %v335
        %v464 = vunpack.c.l.b16 %v336
        %v465 = vunpack.c.l.b16 %v337
        %v466 = vunpack.c.l.b16 %v338
        %v467 = vunpack.c.l.b16 %v339
        %v468 = vunpack.c.l.b16 %v340
        %v469 = vunpack.c.l.b16 %v341
        %v470 = vunpack.c.l.b16 %v342
        %v471 = vpack.c.b16 %v456, %v455
        %v472 = vpack.c.b16 %v458, %v457
        %v473 = vpack.c.b16 %v460, %v459
        %v474 = vpack.c.b16 %v462, %v461
        %v475 = vpack.c.b16 %v464, %v463
        %v476 = vpack.c.b16 %v466, %v465
        %v477 = vpack.c.b16 %v468, %v467
        %v478 = vpack.c.b16 %v470, %v469
        %487 = vmatprep.subr.bf16.mxu0 0
        %488 = vmatpush1.bf16.msra.mxu0 %v471
        %489 = vmatprep.subr.bf16.mxu0 0
        %490 = vmatpush1.bf16.msra.mxu0 %v472
        %491 = vmatprep.subr.bf16.mxu0 0
        %492 = vmatpush1.bf16.msra.mxu0 %v473
        %493 = vmatprep.subr.bf16.mxu0 0
        %494 = vmatpush1.bf16.msra.mxu0 %v474
        %495 = vmatprep.subr.bf16.mxu0 0
        %496 = vmatpush1.bf16.msra.mxu0 %v475
        %497 = vmatprep.subr.bf16.mxu0 0
        %498 = vmatpush1.bf16.msra.mxu0 %v476
        %499 = vmatprep.subr.bf16.mxu0 0
        %500 = vmatpush1.bf16.msra.mxu0 %v477
        %501 = vmatprep.subr.bf16.mxu0 0
        %502 = vmatpush1.bf16.msra.mxu0 %v478
        %503 = vmatprep.subr.bf16.mxu0 0
        %504 = vmatpush1.bf16.msra.mxu0 0
        %505 = vmatprep.subr.bf16.mxu0 0
        %506 = vmatpush1.bf16.msra.mxu0 0
        %507 = vmatprep.subr.bf16.mxu0 0
        %508 = vmatpush1.bf16.msra.mxu0 0
        %509 = vmatprep.subr.bf16.mxu0 0
        %510 = vmatpush1.bf16.msra.mxu0 0
        %511 = vmatprep.subr.bf16.mxu0 0
        %512 = vmatpush1.bf16.msra.mxu0 0
        %513 = vmatprep.subr.bf16.mxu0 0
        %514 = vmatpush1.bf16.msra.mxu0 0
        %515 = vmatprep.subr.bf16.mxu0 0
        %516 = vmatpush1.bf16.msra.mxu0 0
        %517 = vmatprep.subr.bf16.mxu0 0
        %518 = vmatpush1.bf16.msra.mxu0 0
        %519 = vmatprep.mubr.bf16.mxu0 0
        %520 = vmatmul.mubr.bf16.gmra.mrb[0].mxu0 %v407
        %v521 = vpop.f32.mrb[0].mxu0
        %v522 = vadd.f32 0.0, %v521
        %v523 = vpop.f32.mrb[0].mxu0
        %v524 = vpop.f32.mrb[0].mxu0
        %v525 = vadd.f32 0.0, %v524
        %v526 = vpop.f32.mrb[0].mxu0
        %527 = vmatprep.mubr.bf16.mxu0 0
        %528 = vmatmul.mubr.bf16.gmra.mrb[0].mxu0 %v408
        %v529 = vpop.f32.mrb[0].mxu0
        %v530 = vadd.f32 0.0, %v529
        %v531 = vpop.f32.mrb[0].mxu0
        %v532 = vpop.f32.mrb[0].mxu0
        %v533 = vadd.f32 0.0, %v532
        %v534 = vpop.f32.mrb[0].mxu0
        %535 = vmatprep.mubr.bf16.mxu0 0
        %536 = vmatmul.mubr.bf16.gmra.mrb[0].mxu0 %v409
        %v537 = vpop.f32.mrb[0].mxu0
        %v538 = vadd.f32 0.0, %v537
        %v539 = vpop.f32.mrb[0].mxu0
        %v540 = vpop.f32.mrb[0].mxu0
        %v541 = vadd.f32 0.0, %v540
        %v542 = vpop.f32.mrb[0].mxu0
        %543 = vmatprep.mubr.bf16.mxu0 0
        %544 = vmatmul.mubr.bf16.gmra.mrb[0].mxu0 %v410
        %v545 = vpop.f32.mrb[0].mxu0
        %v546 = vadd.f32 0.0, %v545
        %v547 = vpop.f32.mrb[0].mxu0
        %v548 = vpop.f32.mrb[0].mxu0
        %v549 = vadd.f32 0.0, %v548
        %v550 = vpop.f32.mrb[0].mxu0
        %551 = vmatprep.mubr.bf16.mxu0 0
        %552 = vmatmul.mubr.bf16.gmra.mrb[0].mxu0 %v411
        %v553 = vpop.f32.mrb[0].mxu0
        %v554 = vadd.f32 0.0, %v553
        %v555 = vpop.f32.mrb[0].mxu0
        %v556 = vpop.f32.mrb[0].mxu0
        %v557 = vadd.f32 0.0, %v556
        %v558 = vpop.f32.mrb[0].mxu0
        %559 = vmatprep.mubr.bf16.mxu0 0
        %560 = vmatmul.mubr.bf16.gmra.mrb[0].mxu0 %v412
        %v561 = vpop.f32.mrb[0].mxu0
        %v562 = vadd.f32 0.0, %v561
        %v563 = vpop.f32.mrb[0].mxu0
        %v564 = vpop.f32.mrb[0].mxu0
        %v565 = vadd.f32 0.0, %v564
        %v566 = vpop.f32.mrb[0].mxu0
        %567 = vmatprep.mubr.bf16.mxu0 0
        %568 = vmatmul.mubr.bf16.gmra.mrb[0].mxu0 %v413
        %v569 = vpop.f32.mrb[0].mxu0
        %v570 = vadd.f32 0.0, %v569
        %v571 = vpop.f32.mrb[0].mxu0
        %v572 = vpop.f32.mrb[0].mxu0
        %v573 = vadd.f32 0.0, %v572
        %v574 = vpop.f32.mrb[0].mxu0
        %575 = vmatprep.mubr.bf16.mxu0 0
        %576 = vmatmul.mubr.bf16.gmra.mrb[0].mxu0 %v414
        %v577 = vpop.f32.mrb[0].mxu0
        %v578 = vadd.f32 0.0, %v577
        %v579 = vpop.f32.mrb[0].mxu0
        %v580 = vpop.f32.mrb[0].mxu0
        %v581 = vadd.f32 0.0, %v580
        %v582 = vpop.f32.mrb[0].mxu0
        %583 = vmatprep.mubr.bf16.mxu0 0
        %584 = vmatmul.mubr.bf16.gmra.mrb[0].mxu0 %v415
        %v585 = vpop.f32.mrb[0].mxu0
        %v586 = vadd.f32 0.0, %v585
        %v587 = vpop.f32.mrb[0].mxu0
        %v588 = vpop.f32.mrb[0].mxu0
        %v589 = vadd.f32 0.0, %v588
        %v590 = vpop.f32.mrb[0].mxu0
        %591 = vmatprep.mubr.bf16.mxu0 0
        %592 = vmatmul.mubr.bf16.gmra.mrb[0].mxu0 %v416
        %v593 = vpop.f32.mrb[0].mxu0
        %v594 = vadd.f32 0.0, %v593
        %v595 = vpop.f32.mrb[0].mxu0
        %v596 = vpop.f32.mrb[0].mxu0
        %v597 = vadd.f32 0.0, %v596
        %v598 = vpop.f32.mrb[0].mxu0
        %599 = vmatprep.mubr.bf16.mxu0 0
        %600 = vmatmul.mubr.bf16.gmra.mrb[0].mxu0 %v417
        %v601 = vpop.f32.mrb[0].mxu0
        %v602 = vadd.f32 0.0, %v601
        %v603 = vpop.f32.mrb[0].mxu0
        %v604 = vpop.f32.mrb[0].mxu0
        %v605 = vadd.f32 0.0, %v604
        %v606 = vpop.f32.mrb[0].mxu0
        %607 = vmatprep.mubr.bf16.mxu0 0
        %608 = vmatmul.mubr.bf16.gmra.mrb[0].mxu0 %v418
        %v609 = vpop.f32.mrb[0].mxu0
        %v610 = vadd.f32 0.0, %v609
        %v611 = vpop.f32.mrb[0].mxu0
        %v612 = vpop.f32.mrb[0].mxu0
        %v613 = vadd.f32 0.0, %v612
        %v614 = vpop.f32.mrb[0].mxu0
        %615 = vmatprep.mubr.bf16.mxu0 0
        %616 = vmatmul.mubr.bf16.gmra.mrb[0].mxu0 %v419
        %v617 = vpop.f32.mrb[0].mxu0
        %v618 = vadd.f32 0.0, %v617
        %v619 = vpop.f32.mrb[0].mxu0
        %v620 = vpop.f32.mrb[0].mxu0
        %v621 = vadd.f32 0.0, %v620
        %v622 = vpop.f32.mrb[0].mxu0
        %623 = vmatprep.mubr.bf16.mxu0 0
        %624 = vmatmul.mubr.bf16.gmra.mrb[0].mxu0 %v420
        %v625 = vpop.f32.mrb[0].mxu0
        %v626 = vadd.f32 0.0, %v625
        %v627 = vpop.f32.mrb[0].mxu0
        %v628 = vpop.f32.mrb[0].mxu0
        %v629 = vadd.f32 0.0, %v628
        %v630 = vpop.f32.mrb[0].mxu0
        %631 = vmatprep.mubr.bf16.mxu0 0
        %632 = vmatmul.mubr.bf16.gmra.mrb[0].mxu0 %v421
        %v633 = vpop.f32.mrb[0].mxu0
        %v634 = vadd.f32 0.0, %v633
        %v635 = vpop.f32.mrb[0].mxu0
        %v636 = vpop.f32.mrb[0].mxu0
        %v637 = vadd.f32 0.0, %v636
        %v638 = vpop.f32.mrb[0].mxu0
        %639 = vmatprep.mubr.bf16.mxu0 0
        %640 = vmatmul.mubr.bf16.gmra.mrb[0].mxu0 %v422
        %v641 = vpop.f32.mrb[0].mxu0
        %v642 = vadd.f32 0.0, %v641
        %v643 = vpop.f32.mrb[0].mxu0
        %v644 = vpop.f32.mrb[0].mxu0
        %v645 = vadd.f32 0.0, %v644
        %v646 = vpop.f32.mrb[0].mxu0
        %647 = vdwg.mxu0
        %v648 = vpack.c.bf16 %v525, %v522
        %v649 = vpack.c.bf16 %v533, %v530
        %v650 = vpack.c.bf16 %v541, %v538
        %v651 = vpack.c.bf16 %v549, %v546
        %v652 = vpack.c.bf16 %v557, %v554
        %v653 = vpack.c.bf16 %v565, %v562
        %v654 = vpack.c.bf16 %v573, %v570
        %v655 = vpack.c.bf16 %v581, %v578
        %v656 = vpack.c.bf16 %v589, %v586
        %v657 = vpack.c.bf16 %v597, %v594
        %v658 = vpack.c.bf16 %v605, %v602
        %v659 = vpack.c.bf16 %v613, %v610
        %v660 = vpack.c.bf16 %v621, %v618
        %v661 = vpack.c.bf16 %v629, %v626
        %v662 = vpack.c.bf16 %v637, %v634
        %v663 = vpack.c.bf16 %v645, %v642
        %v664 = vld [vmem:[#allocation2] sm:$0xff]
        %v665 = vld [vmem:[#allocation2 + $0x8] sm:$0xff]
        %v666 = vld [vmem:[#allocation2 + $0x10] sm:$0xff]
        %v667 = vld [vmem:[#allocation2 + $0x18] sm:$0xff]
        %v668 = vld [vmem:[#allocation2 + $0x20] sm:$0xff]
        %v669 = vld [vmem:[#allocation2 + $0x28] sm:$0xff]
        %v670 = vld [vmem:[#allocation2 + $0x30] sm:$0xff]
        %v671 = vld [vmem:[#allocation2 + $0x38] sm:$0xff]
        %v672 = vld [vmem:[#allocation2 + $0x40] sm:$0xff]
        %v673 = vld [vmem:[#allocation2 + $0x48] sm:$0xff]
        %v674 = vld [vmem:[#allocation2 + $0x50] sm:$0xff]
        %v675 = vld [vmem:[#allocation2 + $0x58] sm:$0xff]
        %v676 = vld [vmem:[#allocation2 + $0x60] sm:$0xff]
        %v677 = vld [vmem:[#allocation2 + $0x68] sm:$0xff]
        %v678 = vld [vmem:[#allocation2 + $0x70] sm:$0xff]
        %v679 = vld [vmem:[#allocation2 + $0x78] sm:$0xff]
        %v680 = vld [vmem:[%s237] sm:$0xff]
        %v681 = vld [vmem:[%s237 + $0x8] sm:$0xff]
        %v682 = vld [vmem:[%s237 + $0x10] sm:$0xff]
        %v683 = vld [vmem:[%s237 + $0x18] sm:$0xff]
        %v684 = vld [vmem:[%s237 + $0x20] sm:$0xff]
        %v685 = vld [vmem:[%s237 + $0x28] sm:$0xff]
        %v686 = vld [vmem:[%s237 + $0x30] sm:$0xff]
        %v687 = vld [vmem:[%s237 + $0x38] sm:$0xff]
        %v688 = vld [vmem:[%s237 + $0x40] sm:$0xff]
        %v689 = vld [vmem:[%s237 + $0x48] sm:$0xff]
        %v690 = vld [vmem:[%s237 + $0x50] sm:$0xff]
        %v691 = vld [vmem:[%s237 + $0x58] sm:$0xff]
        %v692 = vld [vmem:[%s237 + $0x60] sm:$0xff]
        %v693 = vld [vmem:[%s237 + $0x68] sm:$0xff]
        %v694 = vld [vmem:[%s237 + $0x70] sm:$0xff]
        %v695 = vld [vmem:[%s237 + $0x78] sm:$0xff]
        %v712 = vunpack.c.l.b16 %v680
        %v713 = vunpack.c.h.b16 %v680
        %v714 = vunpack.c.l.b16 %v681
        %v715 = vunpack.c.h.b16 %v681
        %v716 = vunpack.c.l.b16 %v682
        %v717 = vunpack.c.h.b16 %v682
        %v718 = vunpack.c.l.b16 %v683
        %v719 = vunpack.c.h.b16 %v683
        %v720 = vunpack.c.l.b16 %v684
        %v721 = vunpack.c.h.b16 %v684
        %v722 = vunpack.c.l.b16 %v685
        %v723 = vunpack.c.h.b16 %v685
        %v724 = vunpack.c.l.b16 %v686
        %v725 = vunpack.c.h.b16 %v686
        %v726 = vunpack.c.l.b16 %v687
        %v727 = vunpack.c.h.b16 %v687
        %v728 = vunpack.c.l.b16 %v688
        %v729 = vunpack.c.h.b16 %v688
        %v730 = vunpack.c.l.b16 %v689
        %v731 = vunpack.c.h.b16 %v689
        %v732 = vunpack.c.l.b16 %v690
        %v733 = vunpack.c.h.b16 %v690
        %v734 = vunpack.c.l.b16 %v691
        %v735 = vunpack.c.h.b16 %v691
        %v736 = vunpack.c.l.b16 %v692
        %v737 = vunpack.c.h.b16 %v692
        %v738 = vunpack.c.l.b16 %v693
        %v739 = vunpack.c.h.b16 %v693
        %v740 = vunpack.c.l.b16 %v694
        %v741 = vunpack.c.h.b16 %v694
        %v742 = vunpack.c.l.b16 %v695
        %v743 = vunpack.c.h.b16 %v695
        %v744 = vpack.c.b16 %v714, %v712
        %v745 = vpack.c.b16 %v715, %v713
        %v746 = vpack.c.b16 %v718, %v716
        %v747 = vpack.c.b16 %v719, %v717
        %v748 = vpack.c.b16 %v722, %v720
        %v749 = vpack.c.b16 %v723, %v721
        %v750 = vpack.c.b16 %v726, %v724
        %v751 = vpack.c.b16 %v727, %v725
        %v752 = vpack.c.b16 %v730, %v728
        %v753 = vpack.c.b16 %v731, %v729
        %v754 = vpack.c.b16 %v734, %v732
        %v755 = vpack.c.b16 %v735, %v733
        %v756 = vpack.c.b16 %v738, %v736
        %v757 = vpack.c.b16 %v739, %v737
        %v758 = vpack.c.b16 %v742, %v740
        %v759 = vpack.c.b16 %v743, %v741
        %776 = vmatprep.subr.bf16.mxu0 0
        %777 = vmatpush1.bf16.msra.mxu0 %v648
        %778 = vmatprep.subr.bf16.mxu0 0
        %779 = vmatpush1.bf16.msra.mxu0 %v649
        %780 = vmatprep.subr.bf16.mxu0 0
        %781 = vmatpush1.bf16.msra.mxu0 %v650
        %782 = vmatprep.subr.bf16.mxu0 0
        %783 = vmatpush1.bf16.msra.mxu0 %v651
        %784 = vmatprep.subr.bf16.mxu0 0
        %785 = vmatpush1.bf16.msra.mxu0 %v652
        %786 = vmatprep.subr.bf16.mxu0 0
        %787 = vmatpush1.bf16.msra.mxu0 %v653
        %788 = vmatprep.subr.bf16.mxu0 0
        %789 = vmatpush1.bf16.msra.mxu0 %v654
        %790 = vmatprep.subr.bf16.mxu0 0
        %791 = vmatpush1.bf16.msra.mxu0 %v655
        %792 = vmatprep.subr.bf16.mxu0 0
        %793 = vmatpush1.bf16.msra.mxu0 %v656
        %794 = vmatprep.subr.bf16.mxu0 0
        %795 = vmatpush1.bf16.msra.mxu0 %v657
        %796 = vmatprep.subr.bf16.mxu0 0
        %797 = vmatpush1.bf16.msra.mxu0 %v658
        %798 = vmatprep.subr.bf16.mxu0 0
        %799 = vmatpush1.bf16.msra.mxu0 %v659
        %800 = vmatprep.subr.bf16.mxu0 0
        %801 = vmatpush1.bf16.msra.mxu0 %v660
        %802 = vmatprep.subr.bf16.mxu0 0
        %803 = vmatpush1.bf16.msra.mxu0 %v661
        %804 = vmatprep.subr.bf16.mxu0 0
        %805 = vmatpush1.bf16.msra.mxu0 %v662
        %806 = vmatprep.subr.bf16.mxu0 0
        %807 = vmatpush1.bf16.msra.mxu0 %v663
        %808 = vmatprep.mubr.bf16.mxu0 %v745
        %809 = vmatmul.mubr.bf16.gmra.mrb[0].mxu0 %v744
        %v810 = vpop.f32.mrb[0].mxu0
        %v811 = vadd.f32 0.0, %v810
        %v812 = vpop.f32.mrb[0].mxu0
        %v813 = vpop.f32.mrb[0].mxu0
        %v814 = vadd.f32 0.0, %v813
        %v815 = vpop.f32.mrb[0].mxu0
        %816 = vmatprep.mubr.bf16.mxu0 %v747
        %817 = vmatmul.mubr.bf16.gmra.mrb[0].mxu0 %v746
        %v818 = vpop.f32.mrb[0].mxu0
        %v819 = vadd.f32 0.0, %v818
        %v820 = vpop.f32.mrb[0].mxu0
        %v821 = vpop.f32.mrb[0].mxu0
        %v822 = vadd.f32 0.0, %v821
        %v823 = vpop.f32.mrb[0].mxu0
        %824 = vmatprep.mubr.bf16.mxu0 %v749
        %825 = vmatmul.mubr.bf16.gmra.mrb[0].mxu0 %v748
        %v826 = vpop.f32.mrb[0].mxu0
        %v827 = vadd.f32 0.0, %v826
        %v828 = vpop.f32.mrb[0].mxu0
        %v829 = vpop.f32.mrb[0].mxu0
        %v830 = vadd.f32 0.0, %v829
        %v831 = vpop.f32.mrb[0].mxu0
        %832 = vmatprep.mubr.bf16.mxu0 %v751
        %833 = vmatmul.mubr.bf16.gmra.mrb[0].mxu0 %v750
        %v834 = vpop.f32.mrb[0].mxu0
        %v835 = vadd.f32 0.0, %v834
        %v836 = vpop.f32.mrb[0].mxu0
        %v837 = vpop.f32.mrb[0].mxu0
        %v838 = vadd.f32 0.0, %v837
        %v839 = vpop.f32.mrb[0].mxu0
        %840 = vmatprep.mubr.bf16.mxu0 %v753
        %841 = vmatmul.mubr.bf16.gmra.mrb[0].mxu0 %v752
        %v842 = vpop.f32.mrb[0].mxu0
        %v843 = vadd.f32 0.0, %v842
        %v844 = vpop.f32.mrb[0].mxu0
        %v845 = vpop.f32.mrb[0].mxu0
        %v846 = vadd.f32 0.0, %v845
        %v847 = vpop.f32.mrb[0].mxu0
        %848 = vmatprep.mubr.bf16.mxu0 %v755
        %849 = vmatmul.mubr.bf16.gmra.mrb[0].mxu0 %v754
        %v850 = vpop.f32.mrb[0].mxu0
        %v851 = vadd.f32 0.0, %v850
        %v852 = vpop.f32.mrb[0].mxu0
        %v853 = vpop.f32.mrb[0].mxu0
        %v854 = vadd.f32 0.0, %v853
        %v855 = vpop.f32.mrb[0].mxu0
        %856 = vmatprep.mubr.bf16.mxu0 %v757
        %857 = vmatmul.mubr.bf16.gmra.mrb[0].mxu0 %v756
        %v858 = vpop.f32.mrb[0].mxu0
        %v859 = vadd.f32 0.0, %v858
        %v860 = vpop.f32.mrb[0].mxu0
        %v861 = vpop.f32.mrb[0].mxu0
        %v862 = vadd.f32 0.0, %v861
        %v863 = vpop.f32.mrb[0].mxu0
        %864 = vmatprep.mubr.bf16.mxu0 %v759
        %865 = vmatmul.mubr.bf16.gmra.mrb[0].mxu0 %v758
        %v866 = vpop.f32.mrb[0].mxu0
        %v867 = vadd.f32 0.0, %v866
        %v868 = vpop.f32.mrb[0].mxu0
        %v869 = vpop.f32.mrb[0].mxu0
        %v870 = vadd.f32 0.0, %v869
        %v871 = vpop.f32.mrb[0].mxu0
        %872 = vdwg.mxu0
        %v873 = vadd.f32 %v664, %v811
        %v874 = vadd.f32 %v665, %v814
        %v875 = vadd.f32 %v666, %v819
        %v876 = vadd.f32 %v667, %v822
        %v877 = vadd.f32 %v668, %v827
        %v878 = vadd.f32 %v669, %v830
        %v879 = vadd.f32 %v670, %v835
        %v880 = vadd.f32 %v671, %v838
        %v881 = vadd.f32 %v672, %v843
        %v882 = vadd.f32 %v673, %v846
        %v883 = vadd.f32 %v674, %v851
        %v884 = vadd.f32 %v675, %v854
        %v885 = vadd.f32 %v676, %v859
        %v886 = vadd.f32 %v677, %v862
        %v887 = vadd.f32 %v678, %v867
        %v888 = vadd.f32 %v679, %v870
        %889 = vst [vmem:[#allocation2] sm:$0xff] %v873
        %890 = vst [vmem:[#allocation2 + $0x8] sm:$0xff] %v874
        %891 = vst [vmem:[#allocation2 + $0x10] sm:$0xff] %v875
        %892 = vst [vmem:[#allocation2 + $0x18] sm:$0xff] %v876
        %893 = vst [vmem:[#allocation2 + $0x20] sm:$0xff] %v877
        %894 = vst [vmem:[#allocation2 + $0x28] sm:$0xff] %v878
        %895 = vst [vmem:[#allocation2 + $0x30] sm:$0xff] %v879
        %896 = vst [vmem:[#allocation2 + $0x38] sm:$0xff] %v880
        %897 = vst [vmem:[#allocation2 + $0x40] sm:$0xff] %v881
        %898 = vst [vmem:[#allocation2 + $0x48] sm:$0xff] %v882
        %899 = vst [vmem:[#allocation2 + $0x50] sm:$0xff] %v883
        %900 = vst [vmem:[#allocation2 + $0x58] sm:$0xff] %v884
        %901 = vst [vmem:[#allocation2 + $0x60] sm:$0xff] %v885
        %902 = vst [vmem:[#allocation2 + $0x68] sm:$0xff] %v886
        %903 = vst [vmem:[#allocation2 + $0x70] sm:$0xff] %v887
        %904 = vst [vmem:[#allocation2 + $0x78] sm:$0xff] %v888
        // Predicated region
        $region53: #{tpu_custom_call.1} parent=35 // pred_check
          %p905 = pneg %p275
        $region54: #{tpu_custom_call.1} parent=35 // pred_check_branch
          %907 = sbr.rel (%p905) target = $region56
        $region55: #{tpu_custom_call.1} parent=35 // pred_region
          %v908 = vld [vmem:[#allocation2] sm:$0xff]
          %v909 = vld [vmem:[#allocation2 + $0x8] sm:$0xff]
          %v910 = vld [vmem:[#allocation2 + $0x10] sm:$0xff]
          %v911 = vld [vmem:[#allocation2 + $0x18] sm:$0xff]
          %v912 = vld [vmem:[#allocation2 + $0x20] sm:$0xff]
          %v913 = vld [vmem:[#allocation2 + $0x28] sm:$0xff]
          %v914 = vld [vmem:[#allocation2 + $0x30] sm:$0xff]
          %v915 = vld [vmem:[#allocation2 + $0x38] sm:$0xff]
          %v916 = vld [vmem:[#allocation2 + $0x40] sm:$0xff]
          %v917 = vld [vmem:[#allocation2 + $0x48] sm:$0xff]
          %v918 = vld [vmem:[#allocation2 + $0x50] sm:$0xff]
          %v919 = vld [vmem:[#allocation2 + $0x58] sm:$0xff]
          %v920 = vld [vmem:[#allocation2 + $0x60] sm:$0xff]
          %v921 = vld [vmem:[#allocation2 + $0x68] sm:$0xff]
          %v922 = vld [vmem:[#allocation2 + $0x70] sm:$0xff]
          %v923 = vld [vmem:[#allocation2 + $0x78] sm:$0xff]
          %v924 = vld [vmem:[%s3] sm:$0x1]
          %v926 = vlaneseq
          %v927 = vshrl.u32 %v926, 7
          %v928 = vsub.s32 0, %v927
          %v929 = vrot.slane %v924, %v928
          %v931 = vadd.f32 %v908, %v929
          %v932 = vadd.f32 %v909, %v929
          %v933 = vadd.f32 %v910, %v929
          %v934 = vadd.f32 %v911, %v929
          %v935 = vadd.f32 %v912, %v929
          %v936 = vadd.f32 %v913, %v929
          %v937 = vadd.f32 %v914, %v929
          %v938 = vadd.f32 %v915, %v929
          %v939 = vadd.f32 %v916, %v929
          %v940 = vadd.f32 %v917, %v929
          %v941 = vadd.f32 %v918, %v929
          %v942 = vadd.f32 %v919, %v929
          %v943 = vadd.f32 %v920, %v929
          %v944 = vadd.f32 %v921, %v929
          %v945 = vadd.f32 %v922, %v929
          %v946 = vadd.f32 %v923, %v929
          %v947 = vmax.f32 %v931, 0.0
          %v948 = vmax.f32 %v932, 0.0
          %v949 = vmax.f32 %v933, 0.0
          %v950 = vmax.f32 %v934, 0.0
          %v951 = vmax.f32 %v935, 0.0
          %v952 = vmax.f32 %v936, 0.0
          %v953 = vmax.f32 %v937, 0.0
          %v954 = vmax.f32 %v938, 0.0
          %v955 = vmax.f32 %v939, 0.0
          %v956 = vmax.f32 %v940, 0.0
          %v957 = vmax.f32 %v941, 0.0
          %v958 = vmax.f32 %v942, 0.0
          %v959 = vmax.f32 %v943, 0.0
          %v960 = vmax.f32 %v944, 0.0
          %v961 = vmax.f32 %v945, 0.0
          %v962 = vmax.f32 %v946, 0.0
          %v963 = vpack.c.bf16 %v948, %v947
          %v964 = vpack.c.bf16 %v950, %v949
          %v965 = vpack.c.bf16 %v952, %v951
          %v966 = vpack.c.bf16 %v954, %v953
          %v967 = vpack.c.bf16 %v956, %v955
          %v968 = vpack.c.bf16 %v958, %v957
          %v969 = vpack.c.bf16 %v960, %v959
          %v970 = vpack.c.bf16 %v962, %v961
          %v979 = vunpack.c.l.b16 %v963
          %v980 = vunpack.c.h.b16 %v963
          %v981 = vunpack.c.l.b16 %v964
          %v982 = vunpack.c.h.b16 %v964
          %v983 = vunpack.c.l.b16 %v965
          %v984 = vunpack.c.h.b16 %v965
          %v985 = vunpack.c.l.b16 %v966
          %v986 = vunpack.c.h.b16 %v966
          %v987 = vunpack.c.l.b16 %v967
          %v988 = vunpack.c.h.b16 %v967
          %v989 = vunpack.c.l.b16 %v968
          %v990 = vunpack.c.h.b16 %v968
          %v991 = vunpack.c.l.b16 %v969
          %v992 = vunpack.c.h.b16 %v969
          %v993 = vunpack.c.l.b16 %v970
          %v994 = vunpack.c.h.b16 %v970
          %v995 = vpack.c.b16 %v979, %v979
          %v996 = vpack.c.b16 %v980, %v980
          %v997 = vpack.c.b16 %v981, %v981
          %v998 = vpack.c.b16 %v982, %v982
          %v999 = vpack.c.b16 %v983, %v983
          %v1000 = vpack.c.b16 %v984, %v984
          %v1001 = vpack.c.b16 %v985, %v985
          %v1002 = vpack.c.b16 %v986, %v986
          %v1003 = vpack.c.b16 %v987, %v987
          %v1004 = vpack.c.b16 %v988, %v988
          %v1005 = vpack.c.b16 %v989, %v989
          %v1006 = vpack.c.b16 %v990, %v990
          %v1007 = vpack.c.b16 %v991, %v991
          %v1008 = vpack.c.b16 %v992, %v992
          %v1009 = vpack.c.b16 %v993, %v993
          %v1010 = vpack.c.b16 %v994, %v994
          %1027 = vst [vmem:[%s269] sm:$0xf] %v995
          %1028 = vst [vmem:[%s269 + $0x4] sm:$0xf] %v996
          %1029 = vst [vmem:[%s269 + $0x8] sm:$0xf] %v997
          %1030 = vst [vmem:[%s269 + $0xc] sm:$0xf] %v998
          %1031 = vst [vmem:[%s269 + $0x10] sm:$0xf] %v999
          %1032 = vst [vmem:[%s269 + $0x14] sm:$0xf] %v1000
          %1033 = vst [vmem:[%s269 + $0x18] sm:$0xf] %v1001
          %1034 = vst [vmem:[%s269 + $0x1c] sm:$0xf] %v1002
          %1035 = vst [vmem:[%s269 + $0x20] sm:$0xf] %v1003
          %1036 = vst [vmem:[%s269 + $0x24] sm:$0xf] %v1004
          %1037 = vst [vmem:[%s269 + $0x28] sm:$0xf] %v1005
          %1038 = vst [vmem:[%s269 + $0x2c] sm:$0xf] %v1006
          %1039 = vst [vmem:[%s269 + $0x30] sm:$0xf] %v1007
          %1040 = vst [vmem:[%s269 + $0x34] sm:$0xf] %v1008
          %1041 = vst [vmem:[%s269 + $0x38] sm:$0xf] %v1009
          %1042 = vst [vmem:[%s269 + $0x3c] sm:$0xf] %v1010
        $region56: #{tpu_custom_call.1} parent=35 // pred_fallthru
          _
        %s1043 = sand.u32 %s138, 1
        %s1044 = scalar_lea.sflag [#allocation5], %s1043
        %s1045 = sand.u32 %s138, 1
        %s1046 = smul.addr %s1045, 64
        %s1047 = scalar_lea.vmem [#allocation9], %s1046
        // Predicated region
        $region57: #{tpu_custom_call.1} parent=35 // pred_check
          %p1048 = pneg %p148
        $region58: #{tpu_custom_call.1} parent=35 // pred_check_branch
          %1050 = sbr.rel (%p1048) target = $region60
        $region59: #{tpu_custom_call.1} parent=35 // pred_region
          %s1051 = smul.u32 16, %s26
          %s1053 = ssub.s32 1024, 1024
          %1054 = vsyncadd %s1044, %s1053
          %s1055 = smul.addr %s1051, 64
          %s1056 = scalar_lea.hbm %s4, %s1055
          %s1057 = sshll.u32 %s1047, 4
          %s1058 = int_to_ptr.vmem [resolvable:$true] %s1057
          %1063 = dma.vmem_to_hbm [thread:$0]  %s1058, 1024, %s1056, %s1044, 64, 64, 4
        $region60: #{tpu_custom_call.1} parent=35 // pred_fallthru
          _
      $region36: #{tpu_custom_call.1} parent=5 // pred_fallthru
        _
      %p1064 = scmp.le.s32.totalorder 2, %s17
      // Predicated region
      $region61: #{tpu_custom_call.1} parent=5 // pred_check
        %p1065 = pneg %p1064
      $region62: #{tpu_custom_call.1} parent=5 // pred_check_branch
        %1067 = sbr.rel (%p1065) target = $region64
      $region63: #{tpu_custom_call.1} parent=5 // pred_region
        %s1068 = ssub.s32 %s17, 2
        // Predicated region
        $region65: #{tpu_custom_call.1} parent=63 // pred_check
          %p1069 = pneg %p154
        $region66: #{tpu_custom_call.1} parent=63 // pred_check_branch
          %1071 = sbr.rel (%p1069) target = $region68
        $region67: #{tpu_custom_call.1} parent=63 // pred_region
          %s1072 = sand.u32 %s139, 1
          %s1073 = scalar_lea.sflag [#allocation5], %s1072
          %s1074 = sand.u32 %s139, 1
          %s1075 = smul.addr %s1074, 64
          %s1076 = scalar_lea.vmem [#allocation9], %s1075
          %1077 = dma.done %s1073, 1024
        $region68: #{tpu_custom_call.1} parent=63 // pred_fallthru
          _
      $region64: #{tpu_custom_call.1} parent=5 // pred_fallthru
        _
    $region6: #{tpu_custom_call.1} parent=1 // loop_footer
      %s21 = sadd.s32 1, %s17
    $region7: #{tpu_custom_call.1} parent=1 // loop_footer_branch
      %16 = sbr.rel target = $region3
    $region8: #{tpu_custom_call.1} parent=1 // loop_exit
      _
    %1078 = vsyncpa [#allocation4], 1
    %s1079 = scalar_lea.sflag [#allocation4], 1
    %1080 = vsyncpa %s1079, 1
    %1081 = vsyncpa [#allocation7], 1
    %1082 = vsyncpa [#allocation5], 1
    %s1083 = scalar_lea.sflag [#allocation5], 1
    %1084 = vsyncpa %s1083, 1

</llo_original>
